<compile_context>
chip_gen: v7x
topology: tpu7x:2x2x1
jax: 0.10.0
libtpu: 0.0.40
codegen_flags: <defaults>
</compile_context>

<pallas_src>
import functools

import jax
import jax.numpy as jnp
from jax.experimental import pallas as pl
from jax.experimental.pallas import tpu as pltpu


_VMEM_LIMIT_BYTES = 32 * 1024 * 1024       # <= physical VMEM on v5e/v6e/v7x
_DEFAULT_FUSED_BUDGET = 20 * 1024 * 1024   # headroom under the 32 MiB scoped limit
_DEFAULT_BLOCK_BUDGET = 2 * 1024 * 1024    # target bytes per x block (two-pass path)


# ---------------------------------------------------------------------------
# Fused single-pass kernel: one batch element per grid step.
# ---------------------------------------------------------------------------
def _fused_kernel(x_ref, w1t_ref, b1_ref, w2t_ref, b2_ref, o_ref, *, inv_hw):
    # x_ref / o_ref: (C, HW) block (batch dim squeezed).  Weights are transposed so
    # the MLP runs on column vectors: w1t (Cr, C), b1 (Cr, 1), w2t (C, Cr), b2 (C, 1).
    x = x_ref[...]
    xf = x.astype(jnp.float32)
    avg = jnp.sum(xf, axis=-1, keepdims=True) * inv_hw      # (C, 1) true mean
    mx = jnp.max(xf, axis=-1, keepdims=True)                # (C, 1)

    def mlp(v):                                             # v: (C, 1) f32 column
        h = jnp.dot(w1t_ref[...], v, preferred_element_type=jnp.float32) + b1_ref[...]
        h = jnp.maximum(h, 0.0)                              # ReLU
        return jnp.dot(w2t_ref[...], h, preferred_element_type=jnp.float32) + b2_ref[...]

    gate = jax.nn.sigmoid(mlp(avg) + mlp(mx))               # (C, 1) f32
    # (C,1) gate broadcasts over the HW lanes; multiply stays in x.dtype.
    o_ref[...] = x * gate.astype(x.dtype)


# ---------------------------------------------------------------------------
# Fallback pass 1: streaming global sum + max over the flattened spatial axis.
# ---------------------------------------------------------------------------
def _pool_kernel(x_ref, sum_ref, max_ref, *, hw_valid, hw_tile, masked):
    # sum_ref / max_ref: (bc_tile, 1) f32 accumulators resident across the HW axis.
    @pl.when(pl.program_id(1) == 0)
    def _():
        sum_ref[...] = jnp.zeros_like(sum_ref)
        max_ref[...] = jnp.full_like(max_ref, -jnp.inf)

    x = x_ref[...].astype(jnp.float32)
    sum_ref[...] += jnp.sum(x, axis=-1, keepdims=True)       # zero padding is harmless
    if masked:                                                # static: only when padded
        lane = jax.lax.broadcasted_iota(jnp.int32, x.shape, 1)
        x = jnp.where(pl.program_id(1) * hw_tile + lane < hw_valid, x, -jnp.inf)
    max_ref[...] = jnp.maximum(max_ref[...], jnp.max(x, axis=-1, keepdims=True))


# ---------------------------------------------------------------------------
# Fallback pass 2: per-channel scaling of x by the gate.
# ---------------------------------------------------------------------------
def _scale_kernel(x_ref, g_ref, o_ref):
    # Gate is already in x.dtype; (bc_tile, 1) broadcasts over the HW lanes.
    o_ref[...] = x_ref[...] * g_ref[...]


# ---------------------------------------------------------------------------
# Tile selection helpers.
# ---------------------------------------------------------------------------
def _divisor_tile(n, base, cap):
    """Largest multiple of `base` that divides n and is <= cap, else None."""
    best, d = None, base
    while d <= min(n, cap):
        if n % d == 0:
            best = d
        d += base
    return best


def _pick_tiles(BC, HW_work, itemsize, block_budget):
    """Lane-dense, sublane-aligned tiles; ~block_budget bytes per x block; keep the
    BC axis splittable in >=2 grid steps when possible (v7x has 2 TensorCores)."""
    lane_cap = 4096 if itemsize <= 2 else 2048
    hw_tile = _divisor_tile(HW_work, 128, lane_cap) or HW_work   # full dim if unaligned
    row_cap = max(8, block_budget // max(1, hw_tile * itemsize))
    bc_cap = min(256, row_cap)
    if BC >= 16:
        bc_cap = min(bc_cap, max(8, BC // 2))                    # ensure bc_grid >= 2
    bc_tile = _divisor_tile(BC, 8, bc_cap) or BC                 # full dim if no divisor
    if (bc_tile == BC and HW_work % 128 == 0
            and bc_tile * hw_tile * itemsize > 2 * block_budget):
        # Forced full-BC rows (BC not a multiple of 8): shrink the lane tile instead.
        lane_cap = max(128, (2 * block_budget // max(1, bc_tile * itemsize)) // 128 * 128)
        hw_tile = _divisor_tile(HW_work, 128, lane_cap) or hw_tile
    return bc_tile, hw_tile


# ---------------------------------------------------------------------------
# Wrapper.
# ---------------------------------------------------------------------------
def self_calibration(x, w1, b1, w2, b2, *,
                     fused_vmem_budget=_DEFAULT_FUSED_BUDGET,
                     x_block_budget=_DEFAULT_BLOCK_BUDGET):
    """x: (B, C, H, W) NCHW.  Weights stored as (in, out); biases as (1, out)."""
    B, C, H, W = x.shape
    HW = H * W
    BC = B * C
    itemsize = x.dtype.itemsize

    # ---------------- fused single-pass path ----------------
    slab_in = C * HW * itemsize
    slab_f32 = C * HW * 4
    weight_bytes = sum(int(a.size) * a.dtype.itemsize for a in (w1, b1, w2, b2))
    # 2x double-buffered input + 2x double-buffered output + f32 temporaries + weights.
    fused_bytes = 4 * slab_in + 2 * slab_f32 + 2 * weight_bytes
    if fused_bytes <= fused_vmem_budget:
        Cr = w1.shape[1]
        x3d = x.reshape(B, C, HW)
        out3d = pl.pallas_call(
            functools.partial(_fused_kernel, inv_hw=1.0 / HW),
            out_shape=jax.ShapeDtypeStruct((B, C, HW), x.dtype),
            grid=(B,),
            in_specs=[
                pl.BlockSpec((None, C, HW), lambda b: (b, 0, 0)),
                pl.BlockSpec((Cr, C), lambda b: (0, 0)),    # w1.T
                pl.BlockSpec((Cr, 1), lambda b: (0, 0)),    # b1.T
                pl.BlockSpec((C, Cr), lambda b: (0, 0)),    # w2.T
                pl.BlockSpec((C, 1), lambda b: (0, 0)),     # b2.T
            ],
            out_specs=pl.BlockSpec((None, C, HW), lambda b: (b, 0, 0)),
            compiler_params=pltpu.CompilerParams(
                dimension_semantics=("parallel",),
                vmem_limit_bytes=_VMEM_LIMIT_BYTES),
        )(x3d, w1.T, b1.T, w2.T, b2.T)
        return out3d.reshape(B, C, H, W)

    # ---------------- two-pass fallback ----------------
    x2d = x.reshape(BC, HW)
    min_rows = 8 if BC % 8 == 0 else BC
    pad = (HW % 128 != 0) and (min_rows * HW * itemsize > x_block_budget)
    if pad:
        HW_work = ((HW + 127) // 128) * 128
        x_work = jnp.pad(x2d, ((0, 0), (0, HW_work - HW)))   # zeros; max masked in-kernel
    else:
        HW_work, x_work = HW, x2d

    bc_tile, hw_tile = _pick_tiles(BC, HW_work, itemsize, x_block_budget)
    bc_grid = BC // bc_tile
    hw_grid = HW_work // hw_tile

    # Pass 1: per-(b,c) row sum and max with resident f32 accumulators.
    sums, maxes = pl.pallas_call(
        functools.partial(_pool_kernel, hw_valid=HW, hw_tile=hw_tile, masked=pad),
        out_shape=(jax.ShapeDtypeStruct((BC, 1), jnp.float32),
                   jax.ShapeDtypeStruct((BC, 1), jnp.float32)),
        grid=(bc_grid, hw_grid),
        in_specs=[pl.BlockSpec((bc_tile, hw_tile), lambda i, j: (i, j))],
        out_specs=(pl.BlockSpec((bc_tile, 1), lambda i, j: (i, 0)),
                   pl.BlockSpec((bc_tile, 1), lambda i, j: (i, 0))),
        compiler_params=pltpu.CompilerParams(
            dimension_semantics=("parallel", "arbitrary"),
            vmem_limit_bytes=_VMEM_LIMIT_BYTES),
    )(x_work)

    # Gate: the (B, C) MLP is compute noise -> plain XLA (no extra pallas_call launch
    # or f32 HBM round-trips).  Emit the gate already in x.dtype for pass 2.
    avg = sums.reshape(B, C) * jnp.float32(1.0 / HW)
    mx = maxes.reshape(B, C)

    def mlp(v):
        h = jnp.maximum(v @ w1 + b1, 0.0)
        return h @ w2 + b2

    gate = jax.nn.sigmoid(mlp(avg) + mlp(mx)).astype(x.dtype).reshape(BC, 1)

    # Pass 2: scale x by the per-channel gate.
    out2d = pl.pallas_call(
        _scale_kernel,
        out_shape=jax.ShapeDtypeStruct((BC, HW_work), x.dtype),
        grid=(bc_grid, hw_grid),
        in_specs=[pl.BlockSpec((bc_tile, hw_tile), lambda i, j: (i, j)),
                  pl.BlockSpec((bc_tile, 1), lambda i, j: (i, 0))],
        out_specs=pl.BlockSpec((bc_tile, hw_tile), lambda i, j: (i, j)),
        compiler_params=pltpu.CompilerParams(
            dimension_semantics=("parallel", "parallel"),
            vmem_limit_bytes=_VMEM_LIMIT_BYTES),
    )(x_work, gate)

    if pad:
        out2d = out2d[:, :HW]   # rare path; crop cost only paid for unaligned huge HW
    return out2d.reshape(B, C, H, W)


# ---------------------------------------------------------------------------
# Plain-JAX reference and self-test.
# ---------------------------------------------------------------------------
def _reference(x, w1, b1, w2, b2):
    xf = x.astype(jnp.float32)
    avg = jnp.mean(xf, axis=(2, 3))
    mx = jnp.max(xf, axis=(2, 3))

    def mlp(v):
        h = jnp.maximum(v @ w1 + b1, 0.0)
        return h @ w2 + b2

    gate = jax.nn.sigmoid(mlp(avg) + mlp(mx))
    return (xf * gate[:, :, None, None]).astype(x.dtype)


def _make_params(key, C, Cr):
    k1, k2, k3, k4 = jax.random.split(key, 4)
    bound1 = 1.0 / (C ** 0.5)
    bound2 = 1.0 / (Cr ** 0.5)
    w1 = jax.random.uniform(k1, (C, Cr), jnp.float32, -bound1, bound1)
    b1 = jax.random.uniform(k2, (1, Cr), jnp.float32, -bound1, bound1)
    w2 = jax.random.uniform(k3, (Cr, C), jnp.float32, -bound2, bound2)
    b2 = jax.random.uniform(k4, (1, C), jnp.float32, -bound2, bound2)
    return w1, b1, w2, b2


def _check(key, shape, dtype, atol, rtol, **kwargs):
    kx, kp = jax.random.split(key)
    _, C, _, _ = shape
    x = jax.random.normal(kx, shape, dtype=dtype)
    w1, b1, w2, b2 = _make_params(kp, C, C)          # reduction = 1  ->  Cr = C
    out = jax.block_until_ready(self_calibration(x, w1, b1, w2, b2, **kwargs))
    ref = _reference(x, w1, b1, w2, b2)
    assert out.shape == shape and out.dtype == x.dtype
    assert jnp.allclose(out.astype(jnp.float32), ref.astype(jnp.float32),
                        atol=atol, rtol=rtol), f"mismatch for {shape} {dtype} {kwargs}"


if __name__ == "__main__":
    key = jax.random.PRNGKey(0)
    keys = jax.random.split(key, 5)

    # 1) Fused single-pass path (the module's config: B=2, C=4, 16x16 spatial).
    _check(keys[0], (2, 4, 16, 16), jnp.float32, 1e-5, 1e-5)
    # 2) Fused path with bf16 activations (gate computed in f32, applied in bf16).
    _check(keys[1], (2, 4, 16, 16), jnp.bfloat16, 5e-2, 5e-2)
    # 3) Two-pass fallback, 128-aligned HW, BC axis split into >=2 grid steps.
    _check(keys[2], (2, 8, 16, 16), jnp.float32, 1e-5, 1e-5, fused_vmem_budget=0)
    # 4) Two-pass fallback, HW with no multiple-of-128 divisor (full-HW lane blocks).
    _check(keys[3], (2, 8, 7, 7), jnp.float32, 1e-5, 1e-5, fused_vmem_budget=0)
    # 5) Two-pass fallback forced onto the padded path (masked max + cropped output).
    _check(keys[4], (2, 8, 9, 9), jnp.float32, 1e-5, 1e-5,
           fused_vmem_budget=0, x_block_budget=1024)

    print("KERNEL_OK")
</pallas_src>

<mosaic_0001>
module attributes {stable_mosaic.version = 11 : i64} {
  func.func @_fused_kernel(%arg0: i32, %arg1: memref<1x4x256xf32, #tpu.memory_space<vmem>>, %arg2: memref<4x4xf32, #tpu.memory_space<vmem>>, %arg3: memref<4x1xf32, #tpu.memory_space<vmem>>, %arg4: memref<4x4xf32, #tpu.memory_space<vmem>>, %arg5: memref<4x1xf32, #tpu.memory_space<vmem>>, %arg6: memref<1x4x256xf32, #tpu.memory_space<vmem>>) attributes {dimension_semantics = [#tpu.dimension_semantics<parallel>], iteration_bounds = array<i64: 2>, scalar_prefetch = 0 : i64, scratch_operands = 0 : i64, tpu.core_type = #tpu.core_type<tc>, window_params = [{transform_indices = @transform_0, window_bounds = array<i64: 1, 4, 256>}, {pipeline_mode = #tpu.pipeline_mode<synchronous>, transform_indices = @transform_1, window_bounds = array<i64: 4, 4>}, {pipeline_mode = #tpu.pipeline_mode<synchronous>, transform_indices = @transform_2, window_bounds = array<i64: 4, 1>}, {pipeline_mode = #tpu.pipeline_mode<synchronous>, transform_indices = @transform_3, window_bounds = array<i64: 4, 4>}, {pipeline_mode = #tpu.pipeline_mode<synchronous>, transform_indices = @transform_4, window_bounds = array<i64: 4, 1>}, {transform_indices = @transform_5, window_bounds = array<i64: 1, 4, 256>}]} {
    %c0 = arith.constant 0 : index
    %c0_0 = arith.constant 0 : index
    %c0_1 = arith.constant 0 : index
    %0 = vector.load %arg1[%c0, %c0_0, %c0_1] : memref<1x4x256xf32, #tpu.memory_space<vmem>>, vector<1x4x256xf32>
    %1 = vector.shape_cast %0 : vector<1x4x256xf32> to vector<4x256xf32>
    %cst = arith.constant dense<0.000000e+00> : vector<4xf32>
    %2 = vector.multi_reduction <add>, %1, %cst [1] : vector<4x256xf32> to vector<4xf32>
    %3 = vector.shape_cast %2 : vector<4xf32> to vector<4x1xf32>
    %cst_2 = arith.constant 3.906250e-03 : f32
    %4 = vector.broadcast %cst_2 : f32 to vector<4x1xf32>
    %5 = arith.mulf %3, %4 : vector<4x1xf32>
    %cst_3 = arith.constant dense<0xFF800000> : vector<4xf32>
    %6 = vector.multi_reduction <maximumf>, %1, %cst_3 [1] : vector<4x256xf32> to vector<4xf32>
    %7 = vector.shape_cast %6 : vector<4xf32> to vector<4x1xf32>
    %c0_4 = arith.constant 0 : index
    %c0_5 = arith.constant 0 : index
    %8 = vector.load %arg2[%c0_4, %c0_5] : memref<4x4xf32, #tpu.memory_space<vmem>>, vector<4x4xf32>
    %cst_6 = arith.constant dense<0.000000e+00> : vector<4x1xf32>
    %9 = tpu.matmul %8, %5, %cst_6 {dimension_numbers = #tpu.dot_dimension_numbers<[1], [0], [0], [1], [0, 0, 1, 1], [], []>} : vector<4x4xf32>, vector<4x1xf32>, vector<4x1xf32> -> vector<4x1xf32>
    %c0_7 = arith.constant 0 : index
    %c0_8 = arith.constant 0 : index
    %10 = vector.load %arg3[%c0_7, %c0_8] : memref<4x1xf32, #tpu.memory_space<vmem>>, vector<4x1xf32>
    %11 = arith.addf %9, %10 : vector<4x1xf32>
    %cst_9 = arith.constant 0.000000e+00 : f32
    %12 = vector.broadcast %cst_9 : f32 to vector<4x1xf32>
    %13 = arith.maximumf %11, %12 : vector<4x1xf32>
    %c0_10 = arith.constant 0 : index
    %c0_11 = arith.constant 0 : index
    %14 = vector.load %arg4[%c0_10, %c0_11] : memref<4x4xf32, #tpu.memory_space<vmem>>, vector<4x4xf32>
    %cst_12 = arith.constant dense<0.000000e+00> : vector<4x1xf32>
    %15 = tpu.matmul %14, %13, %cst_12 {dimension_numbers = #tpu.dot_dimension_numbers<[1], [0], [0], [1], [0, 0, 1, 1], [], []>} : vector<4x4xf32>, vector<4x1xf32>, vector<4x1xf32> -> vector<4x1xf32>
    %c0_13 = arith.constant 0 : index
    %c0_14 = arith.constant 0 : index
    %16 = vector.load %arg5[%c0_13, %c0_14] : memref<4x1xf32, #tpu.memory_space<vmem>>, vector<4x1xf32>
    %17 = arith.addf %15, %16 : vector<4x1xf32>
    %c0_15 = arith.constant 0 : index
    %c0_16 = arith.constant 0 : index
    %18 = vector.load %arg2[%c0_15, %c0_16] : memref<4x4xf32, #tpu.memory_space<vmem>>, vector<4x4xf32>
    %cst_17 = arith.constant dense<0.000000e+00> : vector<4x1xf32>
    %19 = tpu.matmul %18, %7, %cst_17 {dimension_numbers = #tpu.dot_dimension_numbers<[1], [0], [0], [1], [0, 0, 1, 1], [], []>} : vector<4x4xf32>, vector<4x1xf32>, vector<4x1xf32> -> vector<4x1xf32>
    %c0_18 = arith.constant 0 : index
    %c0_19 = arith.constant 0 : index
    %20 = vector.load %arg3[%c0_18, %c0_19] : memref<4x1xf32, #tpu.memory_space<vmem>>, vector<4x1xf32>
    %21 = arith.addf %19, %20 : vector<4x1xf32>
    %cst_20 = arith.constant 0.000000e+00 : f32
    %22 = vector.broadcast %cst_20 : f32 to vector<4x1xf32>
    %23 = arith.maximumf %21, %22 : vector<4x1xf32>
    %c0_21 = arith.constant 0 : index
    %c0_22 = arith.constant 0 : index
    %24 = vector.load %arg4[%c0_21, %c0_22] : memref<4x4xf32, #tpu.memory_space<vmem>>, vector<4x4xf32>
    %cst_23 = arith.constant dense<0.000000e+00> : vector<4x1xf32>
    %25 = tpu.matmul %24, %23, %cst_23 {dimension_numbers = #tpu.dot_dimension_numbers<[1], [0], [0], [1], [0, 0, 1, 1], [], []>} : vector<4x4xf32>, vector<4x1xf32>, vector<4x1xf32> -> vector<4x1xf32>
    %c0_24 = arith.constant 0 : index
    %c0_25 = arith.constant 0 : index
    %26 = vector.load %arg5[%c0_24, %c0_25] : memref<4x1xf32, #tpu.memory_space<vmem>>, vector<4x1xf32>
    %27 = arith.addf %25, %26 : vector<4x1xf32>
    %28 = arith.addf %17, %27 : vector<4x1xf32>
    %29 = arith.negf %28 : vector<4x1xf32>
    %30 = math.exp %29 : vector<4x1xf32>
    %cst_26 = arith.constant 1.000000e+00 : f32
    %31 = vector.broadcast %cst_26 : f32 to vector<4x1xf32>
    %32 = arith.addf %31, %30 : vector<4x1xf32>
    %33 = arith.divf %31, %32 : vector<4x1xf32>
    %34 = vector.broadcast %33 : vector<4x1xf32> to vector<4x256xf32>
    %35 = arith.mulf %1, %34 : vector<4x256xf32>
    %c0_27 = arith.constant 0 : index
    %c0_28 = arith.constant 0 : index
    %c0_29 = arith.constant 0 : index
    %36 = vector.load %arg6[%c0_27, %c0_28, %c0_29] : memref<1x4x256xf32, #tpu.memory_space<vmem>>, vector<1x4x256xf32>
    %37 = vector.shape_cast %36 : vector<1x4x256xf32> to vector<4x256xf32>
    %38 = vector.shape_cast %35 : vector<4x256xf32> to vector<1x4x256xf32>
    tpu.vector_store %arg6[%c0_27, %c0_28, %c0_29], %38 {strides = array<i32>} : memref<1x4x256xf32, #tpu.memory_space<vmem>>, vector<1x4x256xf32>,
    return
  }
  func.func @transform_0(%arg0: i32) -> (i32, i32, i32) {
    %c0_i32 = arith.constant 0 : i32
    %c0_i32_0 = arith.constant 0 : i32
    %c0_i32_1 = arith.constant 0 : i32
    return %arg0, %c0_i32, %c0_i32_0 : i32, i32, i32
  }
  func.func @transform_1(%arg0: i32) -> (i32, i32) {
    %c0_i32 = arith.constant 0 : i32
    %c0_i32_0 = arith.constant 0 : i32
    %c0_i32_1 = arith.constant 0 : i32
    return %c0_i32, %c0_i32_0 : i32, i32
  }
  func.func @transform_2(%arg0: i32) -> (i32, i32) {
    %c0_i32 = arith.constant 0 : i32
    %c0_i32_0 = arith.constant 0 : i32
    %c0_i32_1 = arith.constant 0 : i32
    return %c0_i32, %c0_i32_0 : i32, i32
  }
  func.func @transform_3(%arg0: i32) -> (i32, i32) {
    %c0_i32 = arith.constant 0 : i32
    %c0_i32_0 = arith.constant 0 : i32
    %c0_i32_1 = arith.constant 0 : i32
    return %c0_i32, %c0_i32_0 : i32, i32
  }
  func.func @transform_4(%arg0: i32) -> (i32, i32) {
    %c0_i32 = arith.constant 0 : i32
    %c0_i32_0 = arith.constant 0 : i32
    %c0_i32_1 = arith.constant 0 : i32
    return %c0_i32, %c0_i32_0 : i32, i32
  }
  func.func @transform_5(%arg0: i32) -> (i32, i32, i32) {
    %c0_i32 = arith.constant 0 : i32
    %c0_i32_0 = arith.constant 0 : i32
    %c0_i32_1 = arith.constant 0 : i32
    return %arg0, %c0_i32, %c0_i32_0 : i32, i32, i32
  }
}

</mosaic_0001>

<llo_original>
// kernel: tpu_custom_call.1
$region0: #{tpu_custom_call.1}
  #allocation0 [shape = 'u32[]', space=smem, size = 0x4, offset = 0x4, fixed_abs, tag = 'smem constant byte address 0x4 - core index']
  #allocation1 [shape = 'u32[144,128]{1,0:T(1,128)}', space=vmem, size = 0x12000, scoped, tag = 'internal scratch']
  %s0 = inlined_call_operand.hbm [shape: f32[2,4,256], index: 0, kind: input, shape index: {}]
  %s1 = inlined_call_operand.vmem [shape: f32[4,4], index: 1, kind: input, shape index: {}]
  %s2 = inlined_call_operand.vmem [shape: f32[4,1], index: 2, kind: input, shape index: {}]
  %s3 = inlined_call_operand.vmem [shape: f32[4,4], index: 3, kind: input, shape index: {}]
  %s4 = inlined_call_operand.vmem [shape: f32[4,1], index: 4, kind: input, shape index: {}]
  %s5 = inlined_call_operand.hbm [shape: f32[2,4,256], index: 5, kind: output, shape index: {}]
  %s6 = sld [smem:[#allocation0]]
  $region57: #{tpu_custom_call.1} parent=0
    _
  %s8 = ssub.s32 1, %s6
  %s9 = scalar_select 0, %s8, %s6
  $region1: #{tpu_custom_call.1} parent=0
    #allocation2 [shape = 'u8[8192]{0}', space=vmem, size = 0x2000, scoped, tag = 'input window, operand 0']
    #allocation3 [shape = 's32[2]{0}', space=sflag, size = 0x8, scoped, tag = 'scoped memory for tpu_custom_call.1']
    #allocation4 [shape = 's32[2]{0}', space=sflag, size = 0x8, scoped, tag = 'scoped memory for tpu_custom_call.1']
    #allocation5 [shape = 'u8[8192]{0}', space=vmem, size = 0x2000, scoped, tag = 'output window, operand 0']
    %10 = vsyncpa [#allocation3], 0
    %s11 = scalar_lea.sflag [#allocation3], 1
    %12 = vsyncpa %s11, 0
    %13 = vsyncpa [#allocation4], 0
    %s14 = scalar_lea.sflag [#allocation4], 1
    %15 = vsyncpa %s14, 0
    loop: start=0, step=1, limit=4
    $region2: #{tpu_custom_call.1} parent=1 // loop_pre_header
      _
    $region3: #{tpu_custom_call.1} parent=1 // loop_header
      %s17 = sphi 0, %s21
      %p18 = scmp.ge.s32.totalorder %s17, 4
      %s27 = sphi 0, %s29
      %s30 = sphi 0, %s27
      %s31 = sphi 0, %s30
      %s47 = sphi 0, %s31
      %s51 = sphi 0, %s51
      %s53 = sphi 0, %s51
      %s54 = sphi 0, %s53
      %s68 = sphi 0, %s54
      %s72 = sphi 0, %s72
      %s74 = sphi 0, %s72
      %s75 = sphi 0, %s74
      %s89 = sphi 0, %s75
      %s93 = sphi 0, %s93
      %s95 = sphi 0, %s93
      %s96 = sphi 0, %s95
      %s110 = sphi 0, %s96
      %s114 = sphi 0, %s114
      %s116 = sphi 0, %s114
      %s117 = sphi 0, %s116
      %s131 = sphi 0, %s117
      %s137 = sphi 0, %s139
      %s140 = sphi 0, %s137
      %s141 = sphi 0, %s140
      %s157 = sphi 0, %s141
    $region4: #{tpu_custom_call.1} parent=1 // loop_header_branch
      %20 = sbr.rel (%p18) target = $region8
    $region5: #{tpu_custom_call.1} parent=1 // loop_body
      %s22 = ssub.s32 %s17, 1
      %s23 = ssub.s32 %s17, 2
      %s24 = sadd.s32 %s17, 1
      %s25 = ssub.s32 %s17, %s24
      %p26 = scmp.eq.s32.totalorder %s25, 0
      %s28 = sadd.s32 %s27, 1
      %s29 = scalar_select %p26, %s27, %s28
      %p32 = pneg %p26
      %p33 = scmp.eq.s32.totalorder %s17, 1
      %p34 = por %p32, %p33
      %p35 = scmp.ne.s32.totalorder %s27, %s30
      %p36 = scmp.eq.s32.totalorder %s17, 0
      %p37 = por %p35, %p36
      %p38 = scmp.ne.s32.totalorder %s27, %s30
      %p39 = scmp.eq.s32.totalorder %s22, 1
      %p40 = por %p38, %p39
      %p41 = scmp.ne.s32.totalorder %s30, %s31
      %p42 = scmp.eq.s32.totalorder %s22, 0
      %p43 = por %p41, %p42
      %p44 = scmp.ne.s32.totalorder %s30, %s31
      %p45 = scmp.eq.s32.totalorder %s23, 1
      %p46 = por %p44, %p45
      %p48 = scmp.ne.s32.totalorder %s31, %s47
      %p49 = scmp.eq.s32.totalorder %s23, 0
      %p50 = por %p48, %p49
      %s52 = sadd.s32 %s51, 1
      %p55 = scmp.eq.s32.totalorder %s17, 1
      %p56 = scmp.ne.s32.totalorder %s51, %s53
      %p57 = scmp.eq.s32.totalorder %s17, 0
      %p58 = por %p56, %p57
      %p59 = scmp.ne.s32.totalorder %s51, %s53
      %p60 = scmp.eq.s32.totalorder %s22, 1
      %p61 = por %p59, %p60
      %p62 = scmp.ne.s32.totalorder %s53, %s54
      %p63 = scmp.eq.s32.totalorder %s22, 0
      %p64 = por %p62, %p63
      %p65 = scmp.ne.s32.totalorder %s53, %s54
      %p66 = scmp.eq.s32.totalorder %s23, 1
      %p67 = por %p65, %p66
      %p69 = scmp.ne.s32.totalorder %s54, %s68
      %p70 = scmp.eq.s32.totalorder %s23, 0
      %p71 = por %p69, %p70
      %s73 = sadd.s32 %s72, 1
      %p76 = scmp.eq.s32.totalorder %s17, 1
      %p77 = scmp.ne.s32.totalorder %s72, %s74
      %p78 = scmp.eq.s32.totalorder %s17, 0
      %p79 = por %p77, %p78
      %p80 = scmp.ne.s32.totalorder %s72, %s74
      %p81 = scmp.eq.s32.totalorder %s22, 1
      %p82 = por %p80, %p81
      %p83 = scmp.ne.s32.totalorder %s74, %s75
      %p84 = scmp.eq.s32.totalorder %s22, 0
      %p85 = por %p83, %p84
      %p86 = scmp.ne.s32.totalorder %s74, %s75
      %p87 = scmp.eq.s32.totalorder %s23, 1
      %p88 = por %p86, %p87
      %p90 = scmp.ne.s32.totalorder %s75, %s89
      %p91 = scmp.eq.s32.totalorder %s23, 0
      %p92 = por %p90, %p91
      %s94 = sadd.s32 %s93, 1
      %p97 = scmp.eq.s32.totalorder %s17, 1
      %p98 = scmp.ne.s32.totalorder %s93, %s95
      %p99 = scmp.eq.s32.totalorder %s17, 0
      %p100 = por %p98, %p99
      %p101 = scmp.ne.s32.totalorder %s93, %s95
      %p102 = scmp.eq.s32.totalorder %s22, 1
      %p103 = por %p101, %p102
      %p104 = scmp.ne.s32.totalorder %s95, %s96
      %p105 = scmp.eq.s32.totalorder %s22, 0
      %p106 = por %p104, %p105
      %p107 = scmp.ne.s32.totalorder %s95, %s96
      %p108 = scmp.eq.s32.totalorder %s23, 1
      %p109 = por %p107, %p108
      %p111 = scmp.ne.s32.totalorder %s96, %s110
      %p112 = scmp.eq.s32.totalorder %s23, 0
      %p113 = por %p111, %p112
      %s115 = sadd.s32 %s114, 1
      %p118 = scmp.eq.s32.totalorder %s17, 1
      %p119 = scmp.ne.s32.totalorder %s114, %s116
      %p120 = scmp.eq.s32.totalorder %s17, 0
      %p121 = por %p119, %p120
      %p122 = scmp.ne.s32.totalorder %s114, %s116
      %p123 = scmp.eq.s32.totalorder %s22, 1
      %p124 = por %p122, %p123
      %p125 = scmp.ne.s32.totalorder %s116, %s117
      %p126 = scmp.eq.s32.totalorder %s22, 0
      %p127 = por %p125, %p126
      %p128 = scmp.ne.s32.totalorder %s116, %s117
      %p129 = scmp.eq.s32.totalorder %s23, 1
      %p130 = por %p128, %p129
      %p132 = scmp.ne.s32.totalorder %s117, %s131
      %p133 = scmp.eq.s32.totalorder %s23, 0
      %p134 = por %p132, %p133
      %s135 = ssub.s32 %s17, %s24
      %p136 = scmp.eq.s32.totalorder %s135, 0
      %s138 = sadd.s32 %s137, 1
      %s139 = scalar_select %p136, %s137, %s138
      %p142 = pneg %p136
      %p143 = scmp.eq.s32.totalorder %s17, 1
      %p144 = por %p142, %p143
      %p145 = scmp.ne.s32.totalorder %s137, %s140
      %p146 = scmp.eq.s32.totalorder %s17, 0
      %p147 = por %p145, %p146
      %p148 = scmp.ne.s32.totalorder %s137, %s140
      %p149 = scmp.eq.s32.totalorder %s22, 1
      %p150 = por %p148, %p149
      %p151 = scmp.ne.s32.totalorder %s140, %s141
      %p152 = scmp.eq.s32.totalorder %s22, 0
      %p153 = por %p151, %p152
      %p154 = scmp.ne.s32.totalorder %s140, %s141
      %p155 = scmp.eq.s32.totalorder %s23, 1
      %p156 = por %p154, %p155
      %p158 = scmp.ne.s32.totalorder %s141, %s157
      %p159 = scmp.eq.s32.totalorder %s23, 0
      %p160 = por %p158, %p159
      %p161 = scmp.le.s32.totalorder 1, %s17
      %p162 = scmp.lt.s32.totalorder %s17, 3
      %p163 = pnand %p161, %p162
      %p164 = pneg %p163
      // Predicated region
      $region9: #{tpu_custom_call.1} parent=5 // pred_check
        _
      $region10: #{tpu_custom_call.1} parent=5 // pred_check_branch
        %166 = sbr.rel (%p163) target = $region12
      $region11: #{tpu_custom_call.1} parent=5 // pred_region
        %s167 = ssub.s32 %s17, 1
        // Predicated region
        $region13: #{tpu_custom_call.1} parent=11 // pred_check
          %p168 = pneg %p64
        $region14: #{tpu_custom_call.1} parent=11 // pred_check_branch
          %170 = sbr.rel (%p168) target = $region16
        $region15: #{tpu_custom_call.1} parent=11 // pred_region
          _
        $region16: #{tpu_custom_call.1} parent=11 // pred_fallthru
          _
        // Predicated region
        $region17: #{tpu_custom_call.1} parent=11 // pred_check
          %p171 = pneg %p85
        $region18: #{tpu_custom_call.1} parent=11 // pred_check_branch
          %173 = sbr.rel (%p171) target = $region20
        $region19: #{tpu_custom_call.1} parent=11 // pred_region
          _
        $region20: #{tpu_custom_call.1} parent=11 // pred_fallthru
          _
        // Predicated region
        $region21: #{tpu_custom_call.1} parent=11 // pred_check
          %p174 = pneg %p106
        $region22: #{tpu_custom_call.1} parent=11 // pred_check_branch
          %176 = sbr.rel (%p174) target = $region24
        $region23: #{tpu_custom_call.1} parent=11 // pred_region
          _
        $region24: #{tpu_custom_call.1} parent=11 // pred_fallthru
          _
        // Predicated region
        $region25: #{tpu_custom_call.1} parent=11 // pred_check
          %p177 = pneg %p127
        $region26: #{tpu_custom_call.1} parent=11 // pred_check_branch
          %179 = sbr.rel (%p177) target = $region28
        $region27: #{tpu_custom_call.1} parent=11 // pred_region
          _
        $region28: #{tpu_custom_call.1} parent=11 // pred_fallthru
          _
      $region12: #{tpu_custom_call.1} parent=5 // pred_fallthru
        _
      %p180 = scmp.lt.s32.totalorder %s17, 2
      // Predicated region
      $region29: #{tpu_custom_call.1} parent=5 // pred_check
        %p181 = pneg %p180
      $region30: #{tpu_custom_call.1} parent=5 // pred_check_branch
        %183 = sbr.rel (%p181) target = $region32
      $region31: #{tpu_custom_call.1} parent=5 // pred_region
        // Predicated region
        $region33: #{tpu_custom_call.1} parent=31 // pred_check
          %p184 = pneg %p37
        $region34: #{tpu_custom_call.1} parent=31 // pred_check_branch
          %186 = sbr.rel (%p184) target = $region36
        $region35: #{tpu_custom_call.1} parent=31 // pred_region
          %s187 = sand.u32 %s27, 1
          %s188 = scalar_lea.sflag [#allocation3], %s187
          %s189 = sand.u32 %s27, 1
          %s190 = smul.addr %s189, 8
          %s191 = scalar_lea.vmem [#allocation2], %s190
          %s193 = ssub.s32 128, 128
          %194 = vsyncadd %s188, %s193
          %s195 = smul.addr %s17, 2
          %s196 = smul.addr %s195, 64
          %s197 = scalar_lea.hbm %s0, %s196
          %s199 = sshll.u32 %s191, 4
          %s200 = int_to_ptr.vmem [resolvable:$true] %s199
          %202 = dma.hbm_to_vmem [thread:$0]  %s197, 128, %s200, %s188
        $region36: #{tpu_custom_call.1} parent=31 // pred_fallthru
          _
      $region32: #{tpu_custom_call.1} parent=5 // pred_fallthru
        _
      %p203 = scmp.le.s32.totalorder 1, %s17
      %p204 = scmp.lt.s32.totalorder %s17, 3
      %p205 = pnand %p203, %p204
      %p206 = pneg %p205
      // Predicated region
      $region37: #{tpu_custom_call.1} parent=5 // pred_check
        _
      $region38: #{tpu_custom_call.1} parent=5 // pred_check_branch
        %208 = sbr.rel (%p205) target = $region40
      $region39: #{tpu_custom_call.1} parent=5 // pred_region
        %s209 = ssub.s32 %s17, 1
        %s210 = sand.u32 %s30, 1
        %s211 = scalar_lea.sflag [#allocation3], %s210
        %s212 = sand.u32 %s30, 1
        %s213 = smul.addr %s212, 8
        %s214 = scalar_lea.vmem [#allocation2], %s213
        // Predicated region
        $region41: #{tpu_custom_call.1} parent=39 // pred_check
          %p215 = pneg %p43
        $region42: #{tpu_custom_call.1} parent=39 // pred_check_branch
          %217 = sbr.rel (%p215) target = $region44
        $region43: #{tpu_custom_call.1} parent=39 // pred_region
          %218 = dma.done %s211, 128
        $region44: #{tpu_custom_call.1} parent=39 // pred_fallthru
          _
        %s219 = sand.u32 %s30, 1
        %s220 = scalar_lea.sflag [#allocation3], %s219
        %s221 = sand.u32 %s30, 1
        %s222 = smul.addr %s221, 8
        %s223 = scalar_lea.vmem [#allocation2], %s222
        %p224 = pneg %p43
        %p225 = pneg %p40
        %p226 = pneg %p64
        %p227 = pneg %p61
        %p228 = pneg %p85
        %p229 = pneg %p82
        %p230 = pneg %p106
        %p231 = pneg %p103
        %p232 = pneg %p127
        %p233 = pneg %p124
        %p234 = pneg %p153
        %p235 = pneg %p150
        %s236 = sand.u32 %s140, 1
        %s237 = scalar_lea.sflag [#allocation4], %s236
        %s238 = sand.u32 %s140, 1
        %s239 = smul.addr %s238, 8
        %s240 = scalar_lea.vmem [#allocation5], %s239
        %v241 = vld [vmem:[%s214] sm:$0xff]
        %v243 = vcombine.high %v241, %v241
        %vm245 = vcmask 1043456
        %v246 = vsel %vm245, %v241, 0.0
        %v247 = vsel %vm245, %v243, 0.0
        %v248 = vadd.f32 %v246, %v247
        %249 = vadd.xlane.f32.xlu0 %v248
        %v250 = vpop.xlane.xlu0 %249
        %v251 = vmul.f32 %v250, 0.00390625
        %v252 = vsel %vm245, %v241, -inf
        %v253 = vsel %vm245, %v243, -inf
        %v254 = vmax.f32 %v252, %v253
        %255 = vmax.xlane.f32.xlu0 %v254
        %v256 = vpop.xlane.xlu0 %255
        %v257 = vld [vmem:[%s1] sm:$0xf]
        %v258 = vld [vmem:[%s2] sm:$0xf]
        %vm259 = vcmask 31744
        %v261 = vsel %vm259, %v257, 0
        %v264 = vsel %vm245, %v251, 0
        %266 = vmatprep.subr.mxu0 0.0
        %267 = vmatpush1.msra.mxu0 %v264
        %268 = vmatprep.subr.mxu0 0.0
        %269 = vmatpush1.msra.mxu0 0.0
        %270 = vmatprep.subr.mxu0 0.0
        %271 = vmatpush1.msra.mxu0 0.0
        %272 = vmatprep.subr.mxu0 0.0
        %273 = vmatpush1.msra.mxu0 0.0
        %274 = vmatprep.subr.mxu0 0.0
        %275 = vmatpush1.msra.mxu0 0.0
        %276 = vmatprep.subr.mxu0 0.0
        %277 = vmatpush1.msra.mxu0 0.0
        %278 = vmatprep.subr.mxu0 0.0
        %279 = vmatpush1.msra.mxu0 0.0
        %280 = vmatprep.subr.mxu0 0.0
        %281 = vmatpush1.msra.mxu0 0.0
        %282 = vmatprep.subr.mxu0 0.0
        %283 = vmatpush1.msra.mxu0 0.0
        %284 = vmatprep.subr.mxu0 0.0
        %285 = vmatpush1.msra.mxu0 0.0
        %286 = vmatprep.subr.mxu0 0.0
        %287 = vmatpush1.msra.mxu0 0.0
        %288 = vmatprep.subr.mxu0 0.0
        %289 = vmatpush1.msra.mxu0 0.0
        %290 = vmatprep.subr.mxu0 0.0
        %291 = vmatpush1.msra.mxu0 0.0
        %292 = vmatprep.subr.mxu0 0.0
        %293 = vmatpush1.msra.mxu0 0.0
        %294 = vmatprep.subr.mxu0 0.0
        %295 = vmatpush1.msra.mxu0 0.0
        %296 = vmatprep.subr.mxu0 0.0
        %297 = vmatpush1.msra.mxu0 0.0
        %298 = vmatprep.subr.mxu0 0.0
        %299 = vmatpush1.msra.mxu0 0.0
        %300 = vmatprep.subr.mxu0 0.0
        %301 = vmatpush1.msra.mxu0 0.0
        %302 = vmatprep.subr.mxu0 0.0
        %303 = vmatpush1.msra.mxu0 0.0
        %304 = vmatprep.subr.mxu0 0.0
        %305 = vmatpush1.msra.mxu0 0.0
        %306 = vmatprep.subr.mxu0 0.0
        %307 = vmatpush1.msra.mxu0 0.0
        %308 = vmatprep.subr.mxu0 0.0
        %309 = vmatpush1.msra.mxu0 0.0
        %310 = vmatprep.subr.mxu0 0.0
        %311 = vmatpush1.msra.mxu0 0.0
        %312 = vmatprep.subr.mxu0 0.0
        %313 = vmatpush1.msra.mxu0 0.0
        %314 = vmatprep.subr.mxu0 0.0
        %315 = vmatpush1.msra.mxu0 0.0
        %316 = vmatprep.subr.mxu0 0.0
        %317 = vmatpush1.msra.mxu0 0.0
        %318 = vmatprep.subr.mxu0 0.0
        %319 = vmatpush1.msra.mxu0 0.0
        %320 = vmatprep.subr.mxu0 0.0
        %321 = vmatpush1.msra.mxu0 0.0
        %322 = vmatprep.subr.mxu0 0.0
        %323 = vmatpush1.msra.mxu0 0.0
        %324 = vmatprep.subr.mxu0 0.0
        %325 = vmatpush1.msra.mxu0 0.0
        %326 = vmatprep.subr.mxu0 0.0
        %327 = vmatpush1.msra.mxu0 0.0
        %328 = vmatprep.subr.mxu0 0.0
        %329 = vmatpush1.msra.mxu0 0.0
        %330 = vmatprep.mubr.f32.mxu0 0.0
        %331 = vmatmul.mubr.f32.gmra.mrb[0].mxu0 %v261
        %v332 = vpop.f32.mrb[0].mxu0
        %v333 = vadd.f32 %v258, %v332
        %v334 = vpop.f32.mrb[0].mxu0
        %335 = vdwg.mxu0
        %v336 = vmax.f32 %v333, 0.0
        %v337 = vld [vmem:[%s3] sm:$0xf]
        %v338 = vld [vmem:[%s4] sm:$0xf]
        %v340 = vsel %vm259, %v337, 0
        %v343 = vsel %vm245, %v336, 0
        %345 = vmatprep.subr.mxu0 0.0
        %346 = vmatpush1.msra.mxu0 %v343
        %347 = vmatprep.subr.mxu0 0.0
        %348 = vmatpush1.msra.mxu0 0.0
        %349 = vmatprep.subr.mxu0 0.0
        %350 = vmatpush1.msra.mxu0 0.0
        %351 = vmatprep.subr.mxu0 0.0
        %352 = vmatpush1.msra.mxu0 0.0
        %353 = vmatprep.subr.mxu0 0.0
        %354 = vmatpush1.msra.mxu0 0.0
        %355 = vmatprep.subr.mxu0 0.0
        %356 = vmatpush1.msra.mxu0 0.0
        %357 = vmatprep.subr.mxu0 0.0
        %358 = vmatpush1.msra.mxu0 0.0
        %359 = vmatprep.subr.mxu0 0.0
        %360 = vmatpush1.msra.mxu0 0.0
        %361 = vmatprep.subr.mxu0 0.0
        %362 = vmatpush1.msra.mxu0 0.0
        %363 = vmatprep.subr.mxu0 0.0
        %364 = vmatpush1.msra.mxu0 0.0
        %365 = vmatprep.subr.mxu0 0.0
        %366 = vmatpush1.msra.mxu0 0.0
        %367 = vmatprep.subr.mxu0 0.0
        %368 = vmatpush1.msra.mxu0 0.0
        %369 = vmatprep.subr.mxu0 0.0
        %370 = vmatpush1.msra.mxu0 0.0
        %371 = vmatprep.subr.mxu0 0.0
        %372 = vmatpush1.msra.mxu0 0.0
        %373 = vmatprep.subr.mxu0 0.0
        %374 = vmatpush1.msra.mxu0 0.0
        %375 = vmatprep.subr.mxu0 0.0
        %376 = vmatpush1.msra.mxu0 0.0
        %377 = vmatprep.subr.mxu0 0.0
        %378 = vmatpush1.msra.mxu0 0.0
        %379 = vmatprep.subr.mxu0 0.0
        %380 = vmatpush1.msra.mxu0 0.0
        %381 = vmatprep.subr.mxu0 0.0
        %382 = vmatpush1.msra.mxu0 0.0
        %383 = vmatprep.subr.mxu0 0.0
        %384 = vmatpush1.msra.mxu0 0.0
        %385 = vmatprep.subr.mxu0 0.0
        %386 = vmatpush1.msra.mxu0 0.0
        %387 = vmatprep.subr.mxu0 0.0
        %388 = vmatpush1.msra.mxu0 0.0
        %389 = vmatprep.subr.mxu0 0.0
        %390 = vmatpush1.msra.mxu0 0.0
        %391 = vmatprep.subr.mxu0 0.0
        %392 = vmatpush1.msra.mxu0 0.0
        %393 = vmatprep.subr.mxu0 0.0
        %394 = vmatpush1.msra.mxu0 0.0
        %395 = vmatprep.subr.mxu0 0.0
        %396 = vmatpush1.msra.mxu0 0.0
        %397 = vmatprep.subr.mxu0 0.0
        %398 = vmatpush1.msra.mxu0 0.0
        %399 = vmatprep.subr.mxu0 0.0
        %400 = vmatpush1.msra.mxu0 0.0
        %401 = vmatprep.subr.mxu0 0.0
        %402 = vmatpush1.msra.mxu0 0.0
        %403 = vmatprep.subr.mxu0 0.0
        %404 = vmatpush1.msra.mxu0 0.0
        %405 = vmatprep.subr.mxu0 0.0
        %406 = vmatpush1.msra.mxu0 0.0
        %407 = vmatprep.subr.mxu0 0.0
        %408 = vmatpush1.msra.mxu0 0.0
        %409 = vmatprep.mubr.f32.mxu0 0.0
        %410 = vmatmul.mubr.f32.gmra.mrb[0].mxu0 %v340
        %v411 = vpop.f32.mrb[0].mxu0
        %v412 = vadd.f32 %v338, %v411
        %v413 = vpop.f32.mrb[0].mxu0
        %414 = vdwg.mxu0
        %v416 = vsel %vm245, %v256, 0
        %418 = vmatprep.subr.mxu0 0.0
        %419 = vmatpush1.msra.mxu0 %v416
        %420 = vmatprep.subr.mxu0 0.0
        %421 = vmatpush1.msra.mxu0 0.0
        %422 = vmatprep.subr.mxu0 0.0
        %423 = vmatpush1.msra.mxu0 0.0
        %424 = vmatprep.subr.mxu0 0.0
        %425 = vmatpush1.msra.mxu0 0.0
        %426 = vmatprep.subr.mxu0 0.0
        %427 = vmatpush1.msra.mxu0 0.0
        %428 = vmatprep.subr.mxu0 0.0
        %429 = vmatpush1.msra.mxu0 0.0
        %430 = vmatprep.subr.mxu0 0.0
        %431 = vmatpush1.msra.mxu0 0.0
        %432 = vmatprep.subr.mxu0 0.0
        %433 = vmatpush1.msra.mxu0 0.0
        %434 = vmatprep.subr.mxu0 0.0
        %435 = vmatpush1.msra.mxu0 0.0
        %436 = vmatprep.subr.mxu0 0.0
        %437 = vmatpush1.msra.mxu0 0.0
        %438 = vmatprep.subr.mxu0 0.0
        %439 = vmatpush1.msra.mxu0 0.0
        %440 = vmatprep.subr.mxu0 0.0
        %441 = vmatpush1.msra.mxu0 0.0
        %442 = vmatprep.subr.mxu0 0.0
        %443 = vmatpush1.msra.mxu0 0.0
        %444 = vmatprep.subr.mxu0 0.0
        %445 = vmatpush1.msra.mxu0 0.0
        %446 = vmatprep.subr.mxu0 0.0
        %447 = vmatpush1.msra.mxu0 0.0
        %448 = vmatprep.subr.mxu0 0.0
        %449 = vmatpush1.msra.mxu0 0.0
        %450 = vmatprep.subr.mxu0 0.0
        %451 = vmatpush1.msra.mxu0 0.0
        %452 = vmatprep.subr.mxu0 0.0
        %453 = vmatpush1.msra.mxu0 0.0
        %454 = vmatprep.subr.mxu0 0.0
        %455 = vmatpush1.msra.mxu0 0.0
        %456 = vmatprep.subr.mxu0 0.0
        %457 = vmatpush1.msra.mxu0 0.0
        %458 = vmatprep.subr.mxu0 0.0
        %459 = vmatpush1.msra.mxu0 0.0
        %460 = vmatprep.subr.mxu0 0.0
        %461 = vmatpush1.msra.mxu0 0.0
        %462 = vmatprep.subr.mxu0 0.0
        %463 = vmatpush1.msra.mxu0 0.0
        %464 = vmatprep.subr.mxu0 0.0
        %465 = vmatpush1.msra.mxu0 0.0
        %466 = vmatprep.subr.mxu0 0.0
        %467 = vmatpush1.msra.mxu0 0.0
        %468 = vmatprep.subr.mxu0 0.0
        %469 = vmatpush1.msra.mxu0 0.0
        %470 = vmatprep.subr.mxu0 0.0
        %471 = vmatpush1.msra.mxu0 0.0
        %472 = vmatprep.subr.mxu0 0.0
        %473 = vmatpush1.msra.mxu0 0.0
        %474 = vmatprep.subr.mxu0 0.0
        %475 = vmatpush1.msra.mxu0 0.0
        %476 = vmatprep.subr.mxu0 0.0
        %477 = vmatpush1.msra.mxu0 0.0
        %478 = vmatprep.subr.mxu0 0.0
        %479 = vmatpush1.msra.mxu0 0.0
        %480 = vmatprep.subr.mxu0 0.0
        %481 = vmatpush1.msra.mxu0 0.0
        %482 = vmatprep.mubr.f32.mxu0 0.0
        %483 = vmatmul.mubr.f32.gmra.mrb[0].mxu0 %v261
        %v484 = vpop.f32.mrb[0].mxu0
        %v485 = vadd.f32 %v258, %v484
        %v486 = vpop.f32.mrb[0].mxu0
        %487 = vdwg.mxu0
        %v488 = vmax.f32 %v485, 0.0
        %v490 = vsel %vm245, %v488, 0
        %492 = vmatprep.subr.mxu0 0.0
        %493 = vmatpush1.msra.mxu0 %v490
        %494 = vmatprep.subr.mxu0 0.0
        %495 = vmatpush1.msra.mxu0 0.0
        %496 = vmatprep.subr.mxu0 0.0
        %497 = vmatpush1.msra.mxu0 0.0
        %498 = vmatprep.subr.mxu0 0.0
        %499 = vmatpush1.msra.mxu0 0.0
        %500 = vmatprep.subr.mxu0 0.0
        %501 = vmatpush1.msra.mxu0 0.0
        %502 = vmatprep.subr.mxu0 0.0
        %503 = vmatpush1.msra.mxu0 0.0
        %504 = vmatprep.subr.mxu0 0.0
        %505 = vmatpush1.msra.mxu0 0.0
        %506 = vmatprep.subr.mxu0 0.0
        %507 = vmatpush1.msra.mxu0 0.0
        %508 = vmatprep.subr.mxu0 0.0
        %509 = vmatpush1.msra.mxu0 0.0
        %510 = vmatprep.subr.mxu0 0.0
        %511 = vmatpush1.msra.mxu0 0.0
        %512 = vmatprep.subr.mxu0 0.0
        %513 = vmatpush1.msra.mxu0 0.0
        %514 = vmatprep.subr.mxu0 0.0
        %515 = vmatpush1.msra.mxu0 0.0
        %516 = vmatprep.subr.mxu0 0.0
        %517 = vmatpush1.msra.mxu0 0.0
        %518 = vmatprep.subr.mxu0 0.0
        %519 = vmatpush1.msra.mxu0 0.0
        %520 = vmatprep.subr.mxu0 0.0
        %521 = vmatpush1.msra.mxu0 0.0
        %522 = vmatprep.subr.mxu0 0.0
        %523 = vmatpush1.msra.mxu0 0.0
        %524 = vmatprep.subr.mxu0 0.0
        %525 = vmatpush1.msra.mxu0 0.0
        %526 = vmatprep.subr.mxu0 0.0
        %527 = vmatpush1.msra.mxu0 0.0
        %528 = vmatprep.subr.mxu0 0.0
        %529 = vmatpush1.msra.mxu0 0.0
        %530 = vmatprep.subr.mxu0 0.0
        %531 = vmatpush1.msra.mxu0 0.0
        %532 = vmatprep.subr.mxu0 0.0
        %533 = vmatpush1.msra.mxu0 0.0
        %534 = vmatprep.subr.mxu0 0.0
        %535 = vmatpush1.msra.mxu0 0.0
        %536 = vmatprep.subr.mxu0 0.0
        %537 = vmatpush1.msra.mxu0 0.0
        %538 = vmatprep.subr.mxu0 0.0
        %539 = vmatpush1.msra.mxu0 0.0
        %540 = vmatprep.subr.mxu0 0.0
        %541 = vmatpush1.msra.mxu0 0.0
        %542 = vmatprep.subr.mxu0 0.0
        %543 = vmatpush1.msra.mxu0 0.0
        %544 = vmatprep.subr.mxu0 0.0
        %545 = vmatpush1.msra.mxu0 0.0
        %546 = vmatprep.subr.mxu0 0.0
        %547 = vmatpush1.msra.mxu0 0.0
        %548 = vmatprep.subr.mxu0 0.0
        %549 = vmatpush1.msra.mxu0 0.0
        %550 = vmatprep.subr.mxu0 0.0
        %551 = vmatpush1.msra.mxu0 0.0
        %552 = vmatprep.subr.mxu0 0.0
        %553 = vmatpush1.msra.mxu0 0.0
        %554 = vmatprep.subr.mxu0 0.0
        %555 = vmatpush1.msra.mxu0 0.0
        %556 = vmatprep.mubr.f32.mxu0 0.0
        %557 = vmatmul.mubr.f32.gmra.mrb[0].mxu0 %v340
        %v558 = vpop.f32.mrb[0].mxu0
        %v559 = vadd.f32 %v338, %v558
        %v560 = vpop.f32.mrb[0].mxu0
        %561 = vdwg.mxu0
        %v562 = vadd.f32 %v412, %v559
        %v563 = vxor.u32 %v562, 2147483648
        %v564 = vmul.f32 %v563, 1.442695
        %v565 = vpow.pop %v564
        %v566 = vadd.f32 %v565, 1.0
        %v567 = vrcp.pop %v566
        %v568 = vmul.f32 1.0, %v567
        %570 = vset.pattern.permute.xlu0 0
        %571 = vperm.xlu0 %570, %v568
        %v572 = vpop.permute.xlu0 %571
        %v574 = vunpack.c.l.s4 839922192
        %v575 = vunpack.c.0.s8 %v574
        %v576 = vlaneseq
        %v577 = vshrl.u32 %v576, 7
        %v578 = vsub.s32 %v575, %v577
        %v579 = vrot.slane %v572, %v578
        %v581 = vmul.f32 %v241, %v579
        %582 = vst [vmem:[%s240] sm:$0xff] %v581
        %s583 = sand.u32 %s140, 1
        %s584 = scalar_lea.sflag [#allocation4], %s583
        %s585 = sand.u32 %s140, 1
        %s586 = smul.addr %s585, 8
        %s587 = scalar_lea.vmem [#allocation5], %s586
        // Predicated region
        $region45: #{tpu_custom_call.1} parent=39 // pred_check
          %p588 = pneg %p150
        $region46: #{tpu_custom_call.1} parent=39 // pred_check_branch
          %590 = sbr.rel (%p588) target = $region48
        $region47: #{tpu_custom_call.1} parent=39 // pred_region
          %s592 = ssub.s32 128, 128
          %593 = vsyncadd %s584, %s592
          %s594 = smul.addr %s22, 2
          %s595 = smul.addr %s594, 64
          %s596 = scalar_lea.hbm %s5, %s595
          %s598 = sshll.u32 %s587, 4
          %s599 = int_to_ptr.vmem [resolvable:$true] %s598
          %601 = dma.vmem_to_hbm [thread:$0]  %s599, 128, %s596, %s584
        $region48: #{tpu_custom_call.1} parent=39 // pred_fallthru
          _
      $region40: #{tpu_custom_call.1} parent=5 // pred_fallthru
        _
      %p602 = scmp.le.s32.totalorder 2, %s17
      // Predicated region
      $region49: #{tpu_custom_call.1} parent=5 // pred_check
        %p603 = pneg %p602
      $region50: #{tpu_custom_call.1} parent=5 // pred_check_branch
        %605 = sbr.rel (%p603) target = $region52
      $region51: #{tpu_custom_call.1} parent=5 // pred_region
        %s606 = ssub.s32 %s17, 2
        // Predicated region
        $region53: #{tpu_custom_call.1} parent=51 // pred_check
          %p607 = pneg %p156
        $region54: #{tpu_custom_call.1} parent=51 // pred_check_branch
          %609 = sbr.rel (%p607) target = $region56
        $region55: #{tpu_custom_call.1} parent=51 // pred_region
          %s610 = sand.u32 %s141, 1
          %s611 = scalar_lea.sflag [#allocation4], %s610
          %s612 = sand.u32 %s141, 1
          %s613 = smul.addr %s612, 8
          %s614 = scalar_lea.vmem [#allocation5], %s613
          %615 = dma.done %s611, 128
        $region56: #{tpu_custom_call.1} parent=51 // pred_fallthru
          _
      $region52: #{tpu_custom_call.1} parent=5 // pred_fallthru
        _
    $region6: #{tpu_custom_call.1} parent=1 // loop_footer
      %s21 = sadd.s32 1, %s17
    $region7: #{tpu_custom_call.1} parent=1 // loop_footer_branch
      %16 = sbr.rel target = $region3
    $region8: #{tpu_custom_call.1} parent=1 // loop_exit
      _
    %616 = vsyncpa [#allocation3], 1
    %s617 = scalar_lea.sflag [#allocation3], 1
    %618 = vsyncpa %s617, 1
    %619 = vsyncpa [#allocation4], 1
    %s620 = scalar_lea.sflag [#allocation4], 1
    %621 = vsyncpa %s620, 1

</llo_original>
